<compile_context>
chip_gen: v7x
topology: tpu7x:2x2x1
jax: 0.10.0
libtpu: 0.0.40
codegen_flags: <defaults>
</compile_context>

<pallas_src>
import functools

import numpy as np
import jax
import jax.numpy as jnp
from jax.experimental import pallas as pl
from jax.experimental.pallas import tpu as pltpu


# ----------------------------------------------------------------------------
# Bilinear interpolation matrices (match PyTorch F.interpolate, bilinear,
# align_corners=False).  Separable form: out = Wh @ x @ Ww^T.
# Flattened (Kronecker) form: vec(out) = kron(Wh, Ww) @ vec(x).
# ----------------------------------------------------------------------------
def _bilinear_matrix_np(out_size: int, in_size: int) -> np.ndarray:
    o = np.arange(out_size, dtype=np.float64)
    scale = in_size / out_size
    src = np.maximum(scale * (o + 0.5) - 0.5, 0.0)
    i0 = np.minimum(np.floor(src).astype(np.int64), in_size - 1)
    i1 = np.minimum(i0 + 1, in_size - 1)
    w1 = src - i0
    w0 = 1.0 - w1
    W = np.zeros((out_size, in_size), dtype=np.float64)
    W[np.arange(out_size), i0] += w0
    W[np.arange(out_size), i1] += w1
    return W


def _kron_bilinear_matrix_np(Ht, Hs, Wt, Ws) -> np.ndarray:
    """M^T with M = kron(Wh, Ww); shape (Hs*Ws, Ht*Wt) so r_flat = x_flat @ M^T."""
    wh = _bilinear_matrix_np(Ht, Hs)
    ww = _bilinear_matrix_np(Wt, Ws)
    return np.kron(wh, ww).T  # (Hs*Ws, Ht*Wt)


# ----------------------------------------------------------------------------
# VMEM budgeting (generation-aware).
# ----------------------------------------------------------------------------
def _vmem_capacity_bytes() -> int:
    try:
        info = pltpu.get_tpu_info()
        for attr in ("vmem_capacity_bytes", "vmem_bytes", "vmem_size_bytes"):
            v = getattr(info, attr, None)
            if v:
                return int(v)
    except Exception:
        pass
    try:
        kind = jax.devices()[0].device_kind.lower()
        if "v7" in kind:
            return 64 << 20
        if "v5" in kind or "v6" in kind:
            return 128 << 20
    except Exception:
        pass
    return 64 << 20  # conservative default (v7x-sized)


def _vmem_budget():
    vmem = _vmem_capacity_bytes()
    # Leave headroom for compiler scratch & pipeline slack.
    vmem_limit = min(int(vmem * 0.70), 100 << 20)
    work_budget = max(4 << 20, vmem_limit // 2)
    return work_budget, vmem_limit


def _align_block(b, total, align=8):
    """Block along a sublane-tiled dim: multiple of 8, or the full extent."""
    total = int(total)
    b = max(1, min(int(b), total))
    if b >= total:
        return total
    b = (b // align) * align
    if b < align:
        b = align
    return total if b >= total else b


# ----------------------------------------------------------------------------
# Flat (lane-dense) kernels: resize = x_flat @ M^T, one MXU matmul.
# ----------------------------------------------------------------------------
def _mse_sigmoid_flat_kernel(s_ref, t_ref, m_ref, out_ref, *, total):
    i = pl.program_id(0)

    s = s_ref[...]                              # (B, Hs*Ws) native dtype (MXU)
    t = t_ref[...].astype(jnp.float32)          # (B, Ht*Wt) f32 elementwise
    B = s.shape[0]

    r = jnp.dot(s, m_ref[...], preferred_element_type=jnp.float32)  # (B, Ht*Wt) f32

    d = jax.nn.sigmoid(r) - jax.nn.sigmoid(t)
    sq = d * d

    # Mask the padded tail of the final (partial) block.
    idx = i * B + jax.lax.broadcasted_iota(jnp.int32, (B, 1), 0)
    sq = jnp.where(idx < total, sq, 0.0)

    out_ref[0] = jnp.sum(sq, axis=0, keepdims=True)   # (1, Ht*Wt) partial sum


def _kl_flat_kernel(s_ref, t_ref, m_ref, out_ref, *, tau, total):
    i = pl.program_id(0)

    s = s_ref[...]                              # (Bn, C, Hs*Ws) native dtype
    t = t_ref[...].astype(jnp.float32)          # (Bn, C, Ht*Wt)
    Bn = s.shape[0]

    # Resize via one batched matmul against the Kronecker matrix (f32 acc).
    r = jnp.einsum('bcd,dD->bcD', s, m_ref[...],
                   preferred_element_type=jnp.float32)   # (Bn, C, Ht*Wt) f32

    inv_tau = jnp.float32(1.0 / tau)
    xs = r * inv_tau
    xt = t * inv_tau

    # log_softmax of student over the channel axis (axis=1).
    ms = jnp.max(xs, axis=1, keepdims=True)
    zs = xs - ms
    log_s = zs - jnp.log(jnp.sum(jnp.exp(zs), axis=1, keepdims=True))

    # Teacher softmax: compute exp(zt) once, reuse for log_pt and pt.
    mt = jnp.max(xt, axis=1, keepdims=True)
    zt = xt - mt
    et = jnp.exp(zt)
    denom = jnp.sum(et, axis=1, keepdims=True)
    log_pt = zt - jnp.log(denom)
    pt = et * pl.reciprocal(denom, approx=False)

    kl = pt * (log_pt - log_s)                  # (Bn, C, Ht*Wt)

    # Mask the padded tail of the final (partial) batch block.
    idx = i * Bn + jax.lax.broadcasted_iota(jnp.int32, (Bn, 1, 1), 0)
    kl = jnp.where(idx < total, kl, 0.0)

    out_ref[...] = jnp.sum(kl, axis=(0, 1), keepdims=True)  # (1, 1, Ht*Wt)


# ----------------------------------------------------------------------------
# Separable fallback kernels (large feature maps where the Kron matrix would
# not fit VMEM, or Wt is already a multiple of 128).
# ----------------------------------------------------------------------------
def _resize_separable(s, wh_ref, wwt_ref):
    """s: (B, Hs, Ws) -> (B, Ht, Wt) f32 via two MXU contractions."""
    B = s.shape[0]
    Ht, Hs = wh_ref.shape
    # W-resize: plain last-axis contraction (no weight broadcast).
    sw = jnp.einsum('bhw,wW->bhW', s, wwt_ref[...],
                    preferred_element_type=jnp.float32)       # (B, Hs, Wt) f32
    # H-resize: batched contraction over the sublane axis; broadcast only the
    # tiny (Ht, Hs) weight so the result lands directly in (B, Ht, Wt) order.
    wh_b = jnp.broadcast_to(wh_ref[...].astype(jnp.float32), (B, Ht, Hs))
    r = jnp.einsum('bhH,bHW->bhW', wh_b, sw,
                   preferred_element_type=jnp.float32)        # (B, Ht, Wt) f32
    return r


def _mse_sigmoid_sep_kernel(s_ref, t_ref, wh_ref, wwt_ref, out_ref, *, total):
    i = pl.program_id(0)
    s = s_ref[...]                                 # (B, Hs, Ws) native
    t = t_ref[...].astype(jnp.float32)             # (B, Ht, Wt)
    B = s.shape[0]

    r = _resize_separable(s, wh_ref, wwt_ref)      # (B, Ht, Wt) f32
    d = jax.nn.sigmoid(r) - jax.nn.sigmoid(t)
    sq = d * d

    idx = i * B + jax.lax.broadcasted_iota(jnp.int32, (B, 1, 1), 0)
    sq = jnp.where(idx < total, sq, 0.0)
    out_ref[0] = jnp.sum(sq, axis=0)               # (Ht, Wt) partial sum


def _kl_sep_kernel(s_ref, t_ref, wh_ref, wwt_ref, out_ref, *, tau, total):
    i = pl.program_id(0)
    s = s_ref[...]                                 # (Bn, C, Hs, Ws) native
    t = t_ref[...].astype(jnp.float32)             # (Bn, C, Ht, Wt)
    Bn, C, Hs, Ws = s.shape
    _, _, Ht, Wt = t.shape

    r = _resize_separable(s.reshape(Bn * C, Hs, Ws), wh_ref, wwt_ref)
    r = r.reshape(Bn, C, Ht, Wt)

    inv_tau = jnp.float32(1.0 / tau)
    xs = r * inv_tau
    xt = t * inv_tau

    ms = jnp.max(xs, axis=1, keepdims=True)
    zs = xs - ms
    log_s = zs - jnp.log(jnp.sum(jnp.exp(zs), axis=1, keepdims=True))

    mt = jnp.max(xt, axis=1, keepdims=True)
    zt = xt - mt
    et = jnp.exp(zt)
    denom = jnp.sum(et, axis=1, keepdims=True)
    log_pt = zt - jnp.log(denom)
    pt = et * pl.reciprocal(denom, approx=False)

    kl = pt * (log_pt - log_s)
    idx = i * Bn + jax.lax.broadcasted_iota(jnp.int32, (Bn, 1, 1, 1), 0)
    kl = jnp.where(idx < total, kl, 0.0)
    out_ref[0] = jnp.sum(kl, axis=(0, 1))          # (Ht, Wt) partial sum


# ----------------------------------------------------------------------------
# Wrapper: CriterionKD.forward
# ----------------------------------------------------------------------------
def criterion_kd(preds_S, preds_T, *, tau=1.0, sigmoid=True, loss_weight=1.0,
                 max_block=None, use_flat=None):
    N, C, Hs, Ws = preds_S.shape
    Nt, Ct, Ht, Wt = preds_T.shape
    assert N == Nt and C == Ct, "student/teacher batch & channels must match"

    hs_ws, ht_wt = Hs * Ws, Ht * Wt
    # Feed the MXU the student's native dtype (bf16 stays bf16; f32 stays f32).
    w_dtype = jnp.bfloat16 if preds_S.dtype == jnp.bfloat16 else jnp.float32
    itemsize = jnp.dtype(preds_S.dtype).itemsize
    scale = jnp.float32(float(loss_weight) / float(N * C * ht_wt))

    work_budget, vmem_limit = _vmem_budget()
    cparams = pltpu.CompilerParams(dimension_semantics=("parallel",),
                                   vmem_limit_bytes=vmem_limit)

    if use_flat is None:
        kron_bytes = hs_ws * ht_wt * jnp.dtype(w_dtype).itemsize
        use_flat = (Wt % 128 != 0) and kron_bytes <= (8 << 20)

    if use_flat:
        # Lane-dense flattened formulation: resize = x_flat @ M^T.
        m = jnp.asarray(_kron_bilinear_matrix_np(Ht, Hs, Wt, Ws), dtype=w_dtype)

        if sigmoid:
            total = N * C
            s = preds_S.reshape(total, hs_ws)      # leading-dim-only reshapes
            t = preds_T.reshape(total, ht_wt)
            # Per-slice working set: native inputs x2 (double-buffer) + f32 temps.
            slice_work = 2 * itemsize * (hs_ws + ht_wt) + 4 * (2 * hs_ws + 6 * ht_wt)
            b = work_budget // max(1, slice_work)
            if max_block is not None:
                b = min(b, int(max_block))
            if total > 1:
                b = min(b, pl.cdiv(total, 2))      # >= 2 blocks for 2-TC chips
            B = _align_block(b, total)
            G = pl.cdiv(total, B)
            kernel = functools.partial(_mse_sigmoid_flat_kernel, total=total)
            partial = pl.pallas_call(
                kernel,
                out_shape=jax.ShapeDtypeStruct((G, 1, ht_wt), jnp.float32),
                grid=(G,),
                in_specs=[
                    pl.BlockSpec((B, hs_ws), lambda i: (i, 0)),
                    pl.BlockSpec((B, ht_wt), lambda i: (i, 0)),
                    pl.BlockSpec((hs_ws, ht_wt), lambda i: (0, 0)),
                ],
                out_specs=pl.BlockSpec((1, 1, ht_wt), lambda i: (i, 0, 0)),
                compiler_params=cparams,
            )(s, t, m)
        else:
            total = N
            s = preds_S.reshape(N, C, hs_ws)
            t = preds_T.reshape(N, C, ht_wt)
            slice_work = (2 * itemsize * C * (hs_ws + ht_wt)
                          + 4 * C * (hs_ws + 10 * ht_wt))
            b = max(1, work_budget // max(1, slice_work))
            if max_block is not None:
                b = min(b, int(max_block))
            if total > 1:
                b = min(b, pl.cdiv(total, 2))
            Bn = max(1, min(b, total))             # leading dim: no alignment
            G = pl.cdiv(total, Bn)
            kernel = functools.partial(_kl_flat_kernel, tau=float(tau), total=total)
            partial = pl.pallas_call(
                kernel,
                out_shape=jax.ShapeDtypeStruct((G, 1, ht_wt), jnp.float32),
                grid=(G,),
                in_specs=[
                    pl.BlockSpec((Bn, C, hs_ws), lambda i: (i, 0, 0)),
                    pl.BlockSpec((Bn, C, ht_wt), lambda i: (i, 0, 0)),
                    pl.BlockSpec((hs_ws, ht_wt), lambda i: (0, 0)),
                ],
                out_specs=pl.BlockSpec((1, 1, ht_wt), lambda i: (i, 0, 0)),
                compiler_params=cparams,
            )(s, t, m)
    else:
        # Separable fallback (large feature maps / Wt already lane-aligned).
        wh = jnp.asarray(_bilinear_matrix_np(Ht, Hs), dtype=w_dtype)         # (Ht, Hs)
        wwt = jnp.asarray(_bilinear_matrix_np(Wt, Ws).T, dtype=w_dtype)      # (Ws, Wt)

        if sigmoid:
            total = N * C
            s = preds_S.reshape(total, Hs, Ws)
            t = preds_T.reshape(total, Ht, Wt)
            slice_work = (2 * itemsize * (hs_ws + ht_wt)
                          + 4 * (2 * hs_ws + 6 * ht_wt) + 4 * Ht * Hs)
            b = max(1, work_budget // max(1, slice_work))
            if max_block is not None:
                b = min(b, int(max_block))
            if total > 1:
                b = min(b, pl.cdiv(total, 2))
            B = max(1, min(b, total))
            G = pl.cdiv(total, B)
            kernel = functools.partial(_mse_sigmoid_sep_kernel, total=total)
            partial = pl.pallas_call(
                kernel,
                out_shape=jax.ShapeDtypeStruct((G, Ht, Wt), jnp.float32),
                grid=(G,),
                in_specs=[
                    pl.BlockSpec((B, Hs, Ws), lambda i: (i, 0, 0)),
                    pl.BlockSpec((B, Ht, Wt), lambda i: (i, 0, 0)),
                    pl.BlockSpec((Ht, Hs), lambda i: (0, 0)),
                    pl.BlockSpec((Ws, Wt), lambda i: (0, 0)),
                ],
                out_specs=pl.BlockSpec((1, Ht, Wt), lambda i: (i, 0, 0)),
                compiler_params=cparams,
            )(s, t, wh, wwt)
        else:
            # TODO(synk): for extremely large (C, H, W) slabs that exceed the
            # per-step budget even at Bn=1, an extra H-row grid axis would be
            # needed; not required at typical KD feature-map sizes.
            total = N
            slice_work = (2 * itemsize * C * (hs_ws + ht_wt)
                          + 4 * C * (hs_ws + 10 * ht_wt) + 4 * Ht * Hs * C)
            b = max(1, work_budget // max(1, slice_work))
            if max_block is not None:
                b = min(b, int(max_block))
            if total > 1:
                b = min(b, pl.cdiv(total, 2))
            Bn = max(1, min(b, total))
            G = pl.cdiv(total, Bn)
            kernel = functools.partial(_kl_sep_kernel, tau=float(tau), total=total)
            partial = pl.pallas_call(
                kernel,
                out_shape=jax.ShapeDtypeStruct((G, Ht, Wt), jnp.float32),
                grid=(G,),
                in_specs=[
                    pl.BlockSpec((Bn, C, Hs, Ws), lambda i: (i, 0, 0, 0)),
                    pl.BlockSpec((Bn, C, Ht, Wt), lambda i: (i, 0, 0, 0)),
                    pl.BlockSpec((Ht, Hs), lambda i: (0, 0)),
                    pl.BlockSpec((Ws, Wt), lambda i: (0, 0)),
                ],
                out_specs=pl.BlockSpec((1, Ht, Wt), lambda i: (i, 0, 0)),
                compiler_params=cparams,
            )(preds_S, preds_T, wh, wwt)

    # Tiny epilogue: sum per-block partials, apply 'mean' scaling / loss weight.
    return jnp.sum(partial) * scale


# ----------------------------------------------------------------------------
# Pure-JAX reference (sanity check only)
# ----------------------------------------------------------------------------
def _ref_loss(preds_S, preds_T, tau, sigmoid, loss_weight):
    _, _, Hs, Ws = preds_S.shape
    _, _, Ht, Wt = preds_T.shape
    wh = jnp.asarray(_bilinear_matrix_np(Ht, Hs), jnp.float32)
    ww = jnp.asarray(_bilinear_matrix_np(Wt, Ws), jnp.float32)
    r = jnp.einsum('hH,ncHW,wW->nchw', wh, preds_S.astype(jnp.float32), ww)
    t = preds_T.astype(jnp.float32)
    if sigmoid:
        loss = jnp.mean((jax.nn.sigmoid(r) - jax.nn.sigmoid(t)) ** 2)
    else:
        log_s = jax.nn.log_softmax(r / tau, axis=1)
        p_t = jax.nn.softmax(t / tau, axis=1)
        loss = jnp.mean(p_t * (jnp.log(p_t) - log_s))
    return loss_weight * loss


if __name__ == "__main__":
    key = jax.random.PRNGKey(0)
    k1, k2 = jax.random.split(key)

    N, C = 3, 4
    Hs, Ws = 8, 8      # student spatial size
    Ht, Wt = 16, 16    # teacher spatial size (resize target)

    preds_S = jax.random.normal(k1, (N, C, Hs, Ws), dtype=jnp.float32)
    preds_T = jax.random.normal(k2, (N, C, Ht, Wt), dtype=jnp.float32)

    ref_mse = _ref_loss(preds_S, preds_T, 1.0, True, 1.0)
    ref_kl = _ref_loss(preds_S, preds_T, 2.0, False, 1.0)

    # Flat (lane-dense) path — default for Wt < 128. Multi-block grid with a
    # masked tail is exercised naturally (total=12 -> blocks of 8, N=3 -> 2).
    loss_mse = jax.block_until_ready(
        criterion_kd(preds_S, preds_T, tau=1.0, sigmoid=True, loss_weight=1.0))
    loss_kl = jax.block_until_ready(
        criterion_kd(preds_S, preds_T, tau=2.0, sigmoid=False, loss_weight=1.0))
    assert jnp.allclose(loss_mse, ref_mse, rtol=1e-4, atol=1e-6), (loss_mse, ref_mse)
    assert jnp.allclose(loss_kl, ref_kl, rtol=1e-4, atol=1e-6), (loss_kl, ref_kl)

    # Separable fallback path (used for large feature maps) — compile/correctness.
    loss_mse_sep = jax.block_until_ready(
        criterion_kd(preds_S, preds_T, tau=1.0, sigmoid=True, use_flat=False))
    loss_kl_sep = jax.block_until_ready(
        criterion_kd(preds_S, preds_T, tau=2.0, sigmoid=False, use_flat=False))
    assert jnp.allclose(loss_mse_sep, ref_mse, rtol=1e-4, atol=1e-6), (loss_mse_sep, ref_mse)
    assert jnp.allclose(loss_kl_sep, ref_kl, rtol=1e-4, atol=1e-6), (loss_kl_sep, ref_kl)

    print("KERNEL_OK")
</pallas_src>

<mosaic_0001>
module attributes {stable_mosaic.version = 11 : i64} {
  func.func @_mse_sigmoid_flat_kernel(%arg0: i32, %arg1: memref<8x64xf32, #tpu.memory_space<vmem>>, %arg2: memref<8x256xf32, #tpu.memory_space<vmem>>, %arg3: memref<64x256xf32, #tpu.memory_space<vmem>>, %arg4: memref<1x1x256xf32, #tpu.memory_space<vmem>>) attributes {dimension_semantics = [#tpu.dimension_semantics<parallel>], iteration_bounds = array<i64: 2>, scalar_prefetch = 0 : i64, scratch_operands = 0 : i64, tpu.core_type = #tpu.core_type<tc>, window_params = [{transform_indices = @transform_0, window_bounds = array<i64: 8, 64>}, {transform_indices = @transform_1, window_bounds = array<i64: 8, 256>}, {pipeline_mode = #tpu.pipeline_mode<synchronous>, transform_indices = @transform_2, window_bounds = array<i64: 64, 256>}, {transform_indices = @transform_3, window_bounds = array<i64: 1, 1, 256>}]} {
    %c0 = arith.constant 0 : index
    %c0_0 = arith.constant 0 : index
    %0 = vector.load %arg1[%c0, %c0_0] : memref<8x64xf32, #tpu.memory_space<vmem>>, vector<8x64xf32>
    %c0_1 = arith.constant 0 : index
    %c0_2 = arith.constant 0 : index
    %1 = vector.load %arg2[%c0_1, %c0_2] : memref<8x256xf32, #tpu.memory_space<vmem>>, vector<8x256xf32>
    %c0_3 = arith.constant 0 : index
    %c0_4 = arith.constant 0 : index
    %2 = vector.load %arg3[%c0_3, %c0_4] : memref<64x256xf32, #tpu.memory_space<vmem>>, vector<64x256xf32>
    %cst = arith.constant dense<0.000000e+00> : vector<8x256xf32>
    %3 = tpu.matmul %0, %2, %cst {dimension_numbers = #tpu.dot_dimension_numbers<[1], [0], [0], [1], [0, 0, 1, 1], [], []>} : vector<8x64xf32>, vector<64x256xf32>, vector<8x256xf32> -> vector<8x256xf32>
    %4 = arith.negf %3 : vector<8x256xf32>
    %5 = math.exp %4 : vector<8x256xf32>
    %cst_5 = arith.constant 1.000000e+00 : f32
    %6 = vector.broadcast %cst_5 : f32 to vector<8x256xf32>
    %7 = arith.addf %6, %5 : vector<8x256xf32>
    %8 = arith.divf %6, %7 : vector<8x256xf32>
    %9 = arith.negf %1 : vector<8x256xf32>
    %10 = math.exp %9 : vector<8x256xf32>
    %cst_6 = arith.constant 1.000000e+00 : f32
    %11 = vector.broadcast %cst_6 : f32 to vector<8x256xf32>
    %12 = arith.addf %11, %10 : vector<8x256xf32>
    %13 = arith.divf %11, %12 : vector<8x256xf32>
    %14 = arith.subf %8, %13 : vector<8x256xf32>
    %15 = arith.mulf %14, %14 : vector<8x256xf32>
    %c8_i32 = arith.constant 8 : i32
    %16 = arith.muli %arg0, %c8_i32 : i32
    %17 = tpu.iota {dimensions = array<i32: 0>} : vector<8x1xi32>
    %18 = vector.broadcast %16 : i32 to vector<8x1xi32>
    %19 = arith.addi %18, %17 : vector<8x1xi32>
    %c12_i32 = arith.constant 12 : i32
    %20 = vector.broadcast %c12_i32 : i32 to vector<8x1xi32>
    %21 = arith.cmpi slt, %19, %20 : vector<8x1xi32>
    %cst_7 = arith.constant 0.000000e+00 : f32
    %22 = vector.shape_cast %21 : vector<8x1xi1> to vector<8x1xi1>
    %23 = vector.broadcast %22 : vector<8x1xi1> to vector<8x256xi1>
    %24 = vector.broadcast %cst_7 : f32 to vector<8x256xf32>
    %25 = arith.select %23, %15, %24 : vector<8x256xi1>, vector<8x256xf32>
    %cst_8 = arith.constant dense<0.000000e+00> : vector<256xf32>
    %26 = vector.multi_reduction <add>, %25, %cst_8 [0] : vector<8x256xf32> to vector<256xf32>
    %27 = vector.shape_cast %26 : vector<256xf32> to vector<1x256xf32>
    %c0_9 = arith.constant 0 : index
    %c0_10 = arith.constant 0 : index
    %c0_11 = arith.constant 0 : index
    %28 = vector.load %arg4[%c0_9, %c0_10, %c0_11] : memref<1x1x256xf32, #tpu.memory_space<vmem>>, vector<1x1x256xf32>
    %29 = vector.shape_cast %28 : vector<1x1x256xf32> to vector<1x256xf32>
    %30 = vector.shape_cast %27 : vector<1x256xf32> to vector<1x1x256xf32>
    tpu.vector_store %arg4[%c0_9, %c0_10, %c0_11], %30 {strides = array<i32>} : memref<1x1x256xf32, #tpu.memory_space<vmem>>, vector<1x1x256xf32>,
    return
  }
  func.func @transform_0(%arg0: i32) -> (i32, i32) {
    %c0_i32 = arith.constant 0 : i32
    %c0_i32_0 = arith.constant 0 : i32
    return %arg0, %c0_i32 : i32, i32
  }
  func.func @transform_1(%arg0: i32) -> (i32, i32) {
    %c0_i32 = arith.constant 0 : i32
    %c0_i32_0 = arith.constant 0 : i32
    return %arg0, %c0_i32 : i32, i32
  }
  func.func @transform_2(%arg0: i32) -> (i32, i32) {
    %c0_i32 = arith.constant 0 : i32
    %c0_i32_0 = arith.constant 0 : i32
    %c0_i32_1 = arith.constant 0 : i32
    return %c0_i32, %c0_i32_0 : i32, i32
  }
  func.func @transform_3(%arg0: i32) -> (i32, i32, i32) {
    %c0_i32 = arith.constant 0 : i32
    %c0_i32_0 = arith.constant 0 : i32
    %c0_i32_1 = arith.constant 0 : i32
    return %arg0, %c0_i32, %c0_i32_0 : i32, i32, i32
  }
}

</mosaic_0001>

<llo_original>
// kernel: tpu_custom_call.1
$region0: #{tpu_custom_call.1}
  #allocation0 [shape = 'u32[]', space=smem, size = 0x4, offset = 0x4, fixed_abs, tag = 'smem constant byte address 0x4 - core index']
  #allocation1 [shape = 'u32[144,128]{1,0:T(1,128)}', space=vmem, size = 0x12000, scoped, tag = 'internal scratch']
  %s0 = inlined_call_operand.hbm [shape: f32[12,64], index: 0, kind: input, shape index: {}]
  %s1 = inlined_call_operand.hbm [shape: f32[12,256], index: 1, kind: input, shape index: {}]
  %s2 = inlined_call_operand.hbm [shape: f32[64,256], index: 2, kind: input, shape index: {}]
  %s3 = inlined_call_operand.hbm [shape: f32[2,1,256], index: 3, kind: output, shape index: {}]
  %s4 = sld [smem:[#allocation0]]
  $region57: #{tpu_custom_call.1} parent=0
    _
  %s6 = ssub.s32 1, %s4
  %s7 = scalar_select 0, %s6, %s4
  $region1: #{tpu_custom_call.1} parent=0
    #allocation2 [shape = 'u8[8192]{0}', space=vmem, size = 0x2000, scoped, tag = 'input window, operand 0']
    #allocation3 [shape = 's32[2]{0}', space=sflag, size = 0x8, scoped, tag = 'scoped memory for tpu_custom_call.1']
    #allocation4 [shape = 's32[2]{0}', space=sflag, size = 0x8, scoped, tag = 'scoped memory for tpu_custom_call.1']
    #allocation5 [shape = 'u8[16384]{0}', space=vmem, size = 0x4000, scoped, tag = 'input window, operand 1']
    #allocation6 [shape = 's32[2]{0}', space=sflag, size = 0x8, scoped, tag = 'scoped memory for tpu_custom_call.1']
    #allocation7 [shape = 'u8[65536]{0}', space=vmem, size = 0x10000, scoped, tag = 'input window, operand 2, single buffered']
    #allocation8 [shape = 'u8[2048]{0}', space=vmem, size = 0x800, scoped, tag = 'output window, operand 0']
    %8 = vsyncpa [#allocation3], 0
    %s9 = scalar_lea.sflag [#allocation3], 1
    %10 = vsyncpa %s9, 0
    %11 = vsyncpa [#allocation6], 0
    %s12 = scalar_lea.sflag [#allocation6], 1
    %13 = vsyncpa %s12, 0
    %14 = vsyncpa [#allocation4], 0
    %s15 = scalar_lea.sflag [#allocation4], 1
    %16 = vsyncpa %s15, 0
    loop: start=0, step=1, limit=4
    $region2: #{tpu_custom_call.1} parent=1 // loop_pre_header
      _
    $region3: #{tpu_custom_call.1} parent=1 // loop_header
      %s18 = sphi 0, %s22
      %p19 = scmp.ge.s32.totalorder %s18, 4
      %s28 = sphi 0, %s30
      %s31 = sphi 0, %s28
      %s32 = sphi 0, %s31
      %s48 = sphi 0, %s32
      %s54 = sphi 0, %s56
      %s57 = sphi 0, %s54
      %s58 = sphi 0, %s57
      %s74 = sphi 0, %s58
      %s78 = sphi 0, %s78
      %s80 = sphi 0, %s78
      %s81 = sphi 0, %s80
      %s95 = sphi 0, %s81
      %s101 = sphi 0, %s103
      %s104 = sphi 0, %s101
      %s105 = sphi 0, %s104
      %s121 = sphi 0, %s105
    $region4: #{tpu_custom_call.1} parent=1 // loop_header_branch
      %21 = sbr.rel (%p19) target = $region8
    $region5: #{tpu_custom_call.1} parent=1 // loop_body
      %s23 = ssub.s32 %s18, 1
      %s24 = ssub.s32 %s18, 2
      %s25 = sadd.s32 %s18, 1
      %s26 = ssub.s32 %s18, %s25
      %p27 = scmp.eq.s32.totalorder %s26, 0
      %s29 = sadd.s32 %s28, 1
      %s30 = scalar_select %p27, %s28, %s29
      %p33 = pneg %p27
      %p34 = scmp.eq.s32.totalorder %s18, 1
      %p35 = por %p33, %p34
      %p36 = scmp.ne.s32.totalorder %s28, %s31
      %p37 = scmp.eq.s32.totalorder %s18, 0
      %p38 = por %p36, %p37
      %p39 = scmp.ne.s32.totalorder %s28, %s31
      %p40 = scmp.eq.s32.totalorder %s23, 1
      %p41 = por %p39, %p40
      %p42 = scmp.ne.s32.totalorder %s31, %s32
      %p43 = scmp.eq.s32.totalorder %s23, 0
      %p44 = por %p42, %p43
      %p45 = scmp.ne.s32.totalorder %s31, %s32
      %p46 = scmp.eq.s32.totalorder %s24, 1
      %p47 = por %p45, %p46
      %p49 = scmp.ne.s32.totalorder %s32, %s48
      %p50 = scmp.eq.s32.totalorder %s24, 0
      %p51 = por %p49, %p50
      %s52 = ssub.s32 %s18, %s25
      %p53 = scmp.eq.s32.totalorder %s52, 0
      %s55 = sadd.s32 %s54, 1
      %s56 = scalar_select %p53, %s54, %s55
      %p59 = pneg %p53
      %p60 = scmp.eq.s32.totalorder %s18, 1
      %p61 = por %p59, %p60
      %p62 = scmp.ne.s32.totalorder %s54, %s57
      %p63 = scmp.eq.s32.totalorder %s18, 0
      %p64 = por %p62, %p63
      %p65 = scmp.ne.s32.totalorder %s54, %s57
      %p66 = scmp.eq.s32.totalorder %s23, 1
      %p67 = por %p65, %p66
      %p68 = scmp.ne.s32.totalorder %s57, %s58
      %p69 = scmp.eq.s32.totalorder %s23, 0
      %p70 = por %p68, %p69
      %p71 = scmp.ne.s32.totalorder %s57, %s58
      %p72 = scmp.eq.s32.totalorder %s24, 1
      %p73 = por %p71, %p72
      %p75 = scmp.ne.s32.totalorder %s58, %s74
      %p76 = scmp.eq.s32.totalorder %s24, 0
      %p77 = por %p75, %p76
      %s79 = sadd.s32 %s78, 1
      %p82 = scmp.eq.s32.totalorder %s18, 1
      %p83 = scmp.ne.s32.totalorder %s78, %s80
      %p84 = scmp.eq.s32.totalorder %s18, 0
      %p85 = por %p83, %p84
      %p86 = scmp.ne.s32.totalorder %s78, %s80
      %p87 = scmp.eq.s32.totalorder %s23, 1
      %p88 = por %p86, %p87
      %p89 = scmp.ne.s32.totalorder %s80, %s81
      %p90 = scmp.eq.s32.totalorder %s23, 0
      %p91 = por %p89, %p90
      %p92 = scmp.ne.s32.totalorder %s80, %s81
      %p93 = scmp.eq.s32.totalorder %s24, 1
      %p94 = por %p92, %p93
      %p96 = scmp.ne.s32.totalorder %s81, %s95
      %p97 = scmp.eq.s32.totalorder %s24, 0
      %p98 = por %p96, %p97
      %s99 = ssub.s32 %s18, %s25
      %p100 = scmp.eq.s32.totalorder %s99, 0
      %s102 = sadd.s32 %s101, 1
      %s103 = scalar_select %p100, %s101, %s102
      %p106 = pneg %p100
      %p107 = scmp.eq.s32.totalorder %s18, 1
      %p108 = por %p106, %p107
      %p109 = scmp.ne.s32.totalorder %s101, %s104
      %p110 = scmp.eq.s32.totalorder %s18, 0
      %p111 = por %p109, %p110
      %p112 = scmp.ne.s32.totalorder %s101, %s104
      %p113 = scmp.eq.s32.totalorder %s23, 1
      %p114 = por %p112, %p113
      %p115 = scmp.ne.s32.totalorder %s104, %s105
      %p116 = scmp.eq.s32.totalorder %s23, 0
      %p117 = por %p115, %p116
      %p118 = scmp.ne.s32.totalorder %s104, %s105
      %p119 = scmp.eq.s32.totalorder %s24, 1
      %p120 = por %p118, %p119
      %p122 = scmp.ne.s32.totalorder %s105, %s121
      %p123 = scmp.eq.s32.totalorder %s24, 0
      %p124 = por %p122, %p123
      %p125 = scmp.le.s32.totalorder 1, %s18
      %p126 = scmp.lt.s32.totalorder %s18, 3
      %p127 = pnand %p125, %p126
      %p128 = pneg %p127
      // Predicated region
      $region9: #{tpu_custom_call.1} parent=5 // pred_check
        _
      $region10: #{tpu_custom_call.1} parent=5 // pred_check_branch
        %130 = sbr.rel (%p127) target = $region12
      $region11: #{tpu_custom_call.1} parent=5 // pred_region
        %s131 = ssub.s32 %s18, 1
        // Predicated region
        $region13: #{tpu_custom_call.1} parent=11 // pred_check
          %p132 = pneg %p91
        $region14: #{tpu_custom_call.1} parent=11 // pred_check_branch
          %134 = sbr.rel (%p132) target = $region16
        $region15: #{tpu_custom_call.1} parent=11 // pred_region
          %s136 = ssub.s32 2048, 2048
          %137 = vsyncadd [#allocation6], %s136
          %s138 = sshll.u32 [#allocation7], 4
          %s139 = int_to_ptr.vmem [resolvable:$true] %s138
          %144 = dma.hbm_to_vmem [thread:$0]  %s2, 2048, %s139, [#allocation6], 256, 256, 16
        $region16: #{tpu_custom_call.1} parent=11 // pred_fallthru
          _
      $region12: #{tpu_custom_call.1} parent=5 // pred_fallthru
        _
      %p145 = scmp.lt.s32.totalorder %s18, 2
      // Predicated region
      $region17: #{tpu_custom_call.1} parent=5 // pred_check
        %p146 = pneg %p145
      $region18: #{tpu_custom_call.1} parent=5 // pred_check_branch
        %148 = sbr.rel (%p146) target = $region20
      $region19: #{tpu_custom_call.1} parent=5 // pred_region
        // Predicated region
        $region21: #{tpu_custom_call.1} parent=19 // pred_check
          %p149 = pneg %p38
        $region22: #{tpu_custom_call.1} parent=19 // pred_check_branch
          %151 = sbr.rel (%p149) target = $region24
        $region23: #{tpu_custom_call.1} parent=19 // pred_region
          %s152 = sand.u32 %s28, 1
          %s153 = scalar_lea.sflag [#allocation3], %s152
          %s154 = sand.u32 %s28, 1
          %s155 = smul.addr %s154, 8
          %s156 = scalar_lea.vmem [#allocation2], %s155
          %s158 = ssub.s32 128, 128
          %159 = vsyncadd %s153, %s158
          %s160 = smul.addr %s18, 128
          %s161 = scalar_lea.hbm %s0, %s160
          %s163 = sshll.u32 %s156, 4
          %s164 = int_to_ptr.vmem [resolvable:$true] %s163
          %166 = dma.hbm_to_vmem [thread:$0]  %s161, 128, %s164, %s153
        $region24: #{tpu_custom_call.1} parent=19 // pred_fallthru
          _
        // Predicated region
        $region25: #{tpu_custom_call.1} parent=19 // pred_check
          %p167 = pneg %p64
        $region26: #{tpu_custom_call.1} parent=19 // pred_check_branch
          %169 = sbr.rel (%p167) target = $region28
        $region27: #{tpu_custom_call.1} parent=19 // pred_region
          %s170 = sand.u32 %s18, 1
          %s171 = scalar_lea.sflag [#allocation6], %s170
          %s172 = sand.u32 %s54, 1
          %s173 = smul.addr %s172, 16
          %s174 = scalar_lea.vmem [#allocation5], %s173
          %s176 = ssub.s32 256, 256
          %177 = vsyncadd %s171, %s176
          %s178 = smul.addr %s18, 2
          %s179 = smul.addr %s178, 128
          %s180 = scalar_lea.hbm %s1, %s179
          %s182 = sshll.u32 %s174, 4
          %s183 = int_to_ptr.vmem [resolvable:$true] %s182
          %185 = dma.hbm_to_vmem [thread:$0]  %s180, 256, %s183, %s171
        $region28: #{tpu_custom_call.1} parent=19 // pred_fallthru
          _
      $region20: #{tpu_custom_call.1} parent=5 // pred_fallthru
        _
      %p186 = scmp.le.s32.totalorder 1, %s18
      %p187 = scmp.lt.s32.totalorder %s18, 3
      %p188 = pnand %p186, %p187
      %p189 = pneg %p188
      // Predicated region
      $region29: #{tpu_custom_call.1} parent=5 // pred_check
        _
      $region30: #{tpu_custom_call.1} parent=5 // pred_check_branch
        %191 = sbr.rel (%p188) target = $region32
      $region31: #{tpu_custom_call.1} parent=5 // pred_region
        %s192 = ssub.s32 %s18, 1
        %s193 = sand.u32 %s31, 1
        %s194 = scalar_lea.sflag [#allocation3], %s193
        %s195 = sand.u32 %s31, 1
        %s196 = smul.addr %s195, 8
        %s197 = scalar_lea.vmem [#allocation2], %s196
        // Predicated region
        $region33: #{tpu_custom_call.1} parent=31 // pred_check
          %p198 = pneg %p44
        $region34: #{tpu_custom_call.1} parent=31 // pred_check_branch
          %200 = sbr.rel (%p198) target = $region36
        $region35: #{tpu_custom_call.1} parent=31 // pred_region
          %201 = dma.done %s194, 128
        $region36: #{tpu_custom_call.1} parent=31 // pred_fallthru
          _
        %s202 = sand.u32 %s23, 1
        %s203 = scalar_lea.sflag [#allocation6], %s202
        %s204 = sand.u32 %s57, 1
        %s205 = smul.addr %s204, 16
        %s206 = scalar_lea.vmem [#allocation5], %s205
        // Predicated region
        $region37: #{tpu_custom_call.1} parent=31 // pred_check
          %p207 = pneg %p70
        $region38: #{tpu_custom_call.1} parent=31 // pred_check_branch
          %209 = sbr.rel (%p207) target = $region40
        $region39: #{tpu_custom_call.1} parent=31 // pred_region
          %210 = dma.done %s203, 256
        $region40: #{tpu_custom_call.1} parent=31 // pred_fallthru
          _
        // Predicated region
        $region41: #{tpu_custom_call.1} parent=31 // pred_check
          %p211 = pneg %p91
        $region42: #{tpu_custom_call.1} parent=31 // pred_check_branch
          %213 = sbr.rel (%p211) target = $region44
        $region43: #{tpu_custom_call.1} parent=31 // pred_region
          %214 = dma.done [#allocation6], 2048
        $region44: #{tpu_custom_call.1} parent=31 // pred_fallthru
          _
        %s215 = sand.u32 %s31, 1
        %s216 = scalar_lea.sflag [#allocation3], %s215
        %s217 = sand.u32 %s31, 1
        %s218 = smul.addr %s217, 8
        %s219 = scalar_lea.vmem [#allocation2], %s218
        %p220 = pneg %p44
        %p221 = pneg %p41
        %s222 = sand.u32 %s23, 1
        %s223 = scalar_lea.sflag [#allocation6], %s222
        %s224 = sand.u32 %s57, 1
        %s225 = smul.addr %s224, 16
        %s226 = scalar_lea.vmem [#allocation5], %s225
        %p227 = pneg %p70
        %p228 = pneg %p67
        %p229 = pneg %p91
        %p230 = pneg %p88
        %p231 = pneg %p117
        %p232 = pneg %p114
        %s233 = sand.u32 %s104, 1
        %s234 = scalar_lea.sflag [#allocation4], %s233
        %s235 = sand.u32 %s104, 1
        %s236 = smul.addr %s235, 2
        %s237 = scalar_lea.vmem [#allocation8], %s236
        %v238 = vld [vmem:[%s197] sm:$0xff]
        %v239 = vld [vmem:[%s206] sm:$0xff]
        %v240 = vld [vmem:[%s206 + $0x8] sm:$0xff]
        %v241 = vld [vmem:[#allocation7] sm:$0xff]
        %v242 = vld [vmem:[#allocation7 + $0x8] sm:$0xff]
        %v243 = vld [vmem:[#allocation7 + $0x10] sm:$0xff]
        %v244 = vld [vmem:[#allocation7 + $0x18] sm:$0xff]
        %v245 = vld [vmem:[#allocation7 + $0x20] sm:$0xff]
        %v246 = vld [vmem:[#allocation7 + $0x28] sm:$0xff]
        %v247 = vld [vmem:[#allocation7 + $0x30] sm:$0xff]
        %v248 = vld [vmem:[#allocation7 + $0x38] sm:$0xff]
        %v249 = vld [vmem:[#allocation7 + $0x40] sm:$0xff]
        %v250 = vld [vmem:[#allocation7 + $0x48] sm:$0xff]
        %v251 = vld [vmem:[#allocation7 + $0x50] sm:$0xff]
        %v252 = vld [vmem:[#allocation7 + $0x58] sm:$0xff]
        %v253 = vld [vmem:[#allocation7 + $0x60] sm:$0xff]
        %v254 = vld [vmem:[#allocation7 + $0x68] sm:$0xff]
        %v255 = vld [vmem:[#allocation7 + $0x70] sm:$0xff]
        %v256 = vld [vmem:[#allocation7 + $0x78] sm:$0xff]
        %vm257 = vcmask 523264
        %v259 = vsel %vm257, %v238, 0
        %261 = vmatprep.subr.mxu0 %v242
        %262 = vmatpush1.msra.mxu0 %v241
        %263 = vmatprep.subr.mxu0 %v244
        %264 = vmatpush1.msra.mxu0 %v243
        %265 = vmatprep.subr.mxu0 %v246
        %266 = vmatpush1.msra.mxu0 %v245
        %267 = vmatprep.subr.mxu0 %v248
        %268 = vmatpush1.msra.mxu0 %v247
        %269 = vmatprep.subr.mxu0 %v250
        %270 = vmatpush1.msra.mxu0 %v249
        %271 = vmatprep.subr.mxu0 %v252
        %272 = vmatpush1.msra.mxu0 %v251
        %273 = vmatprep.subr.mxu0 %v254
        %274 = vmatpush1.msra.mxu0 %v253
        %275 = vmatprep.subr.mxu0 %v256
        %276 = vmatpush1.msra.mxu0 %v255
        %277 = vmatprep.subr.mxu0 0.0
        %278 = vmatpush1.msra.mxu0 0.0
        %279 = vmatprep.subr.mxu0 0.0
        %280 = vmatpush1.msra.mxu0 0.0
        %281 = vmatprep.subr.mxu0 0.0
        %282 = vmatpush1.msra.mxu0 0.0
        %283 = vmatprep.subr.mxu0 0.0
        %284 = vmatpush1.msra.mxu0 0.0
        %285 = vmatprep.subr.mxu0 0.0
        %286 = vmatpush1.msra.mxu0 0.0
        %287 = vmatprep.subr.mxu0 0.0
        %288 = vmatpush1.msra.mxu0 0.0
        %289 = vmatprep.subr.mxu0 0.0
        %290 = vmatpush1.msra.mxu0 0.0
        %291 = vmatprep.subr.mxu0 0.0
        %292 = vmatpush1.msra.mxu0 0.0
        %293 = vmatprep.subr.mxu0 0.0
        %294 = vmatpush1.msra.mxu0 0.0
        %295 = vmatprep.subr.mxu0 0.0
        %296 = vmatpush1.msra.mxu0 0.0
        %297 = vmatprep.subr.mxu0 0.0
        %298 = vmatpush1.msra.mxu0 0.0
        %299 = vmatprep.subr.mxu0 0.0
        %300 = vmatpush1.msra.mxu0 0.0
        %301 = vmatprep.subr.mxu0 0.0
        %302 = vmatpush1.msra.mxu0 0.0
        %303 = vmatprep.subr.mxu0 0.0
        %304 = vmatpush1.msra.mxu0 0.0
        %305 = vmatprep.subr.mxu0 0.0
        %306 = vmatpush1.msra.mxu0 0.0
        %307 = vmatprep.subr.mxu0 0.0
        %308 = vmatpush1.msra.mxu0 0.0
        %309 = vmatprep.subr.mxu0 0.0
        %310 = vmatpush1.msra.mxu0 0.0
        %311 = vmatprep.subr.mxu0 0.0
        %312 = vmatpush1.msra.mxu0 0.0
        %313 = vmatprep.subr.mxu0 0.0
        %314 = vmatpush1.msra.mxu0 0.0
        %315 = vmatprep.subr.mxu0 0.0
        %316 = vmatpush1.msra.mxu0 0.0
        %317 = vmatprep.subr.mxu0 0.0
        %318 = vmatpush1.msra.mxu0 0.0
        %319 = vmatprep.subr.mxu0 0.0
        %320 = vmatpush1.msra.mxu0 0.0
        %321 = vmatprep.subr.mxu0 0.0
        %322 = vmatpush1.msra.mxu0 0.0
        %323 = vmatprep.subr.mxu0 0.0
        %324 = vmatpush1.msra.mxu0 0.0
        %325 = vmatprep.mubr.f32.mxu0 0.0
        %326 = vmatmul.mubr.f32.gmra.mrb[0].mxu0 %v259
        %v327 = vpop.f32.mrb[0].mxu0
        %v328 = vadd.f32 0.0, %v327
        %v329 = vpop.f32.mrb[0].mxu0
        %v330 = vadd.f32 0.0, %v329
        %331 = vdwg.mxu0
        %v332 = vxor.u32 %v328, 2147483648
        %v333 = vxor.u32 %v330, 2147483648
        %v334 = vmul.f32 %v332, 1.442695
        %v335 = vpow.pop %v334
        %v336 = vmul.f32 %v333, 1.442695
        %v337 = vpow.pop %v336
        %v338 = vadd.f32 %v335, 1.0
        %v339 = vadd.f32 %v337, 1.0
        %v340 = vrcp.pop %v338
        %v341 = vmul.f32 1.0, %v340
        %v342 = vrcp.pop %v339
        %v343 = vmul.f32 1.0, %v342
        %v344 = vxor.u32 %v239, 2147483648
        %v345 = vxor.u32 %v240, 2147483648
        %v346 = vmul.f32 %v344, 1.442695
        %v347 = vpow.pop %v346
        %v348 = vmul.f32 %v345, 1.442695
        %v349 = vpow.pop %v348
        %v350 = vadd.f32 %v347, 1.0
        %v351 = vadd.f32 %v349, 1.0
        %v352 = vrcp.pop %v350
        %v353 = vmul.f32 1.0, %v352
        %v354 = vrcp.pop %v351
        %v355 = vmul.f32 1.0, %v354
        %v356 = vsub.f32 %v341, %v353
        %v357 = vsub.f32 %v343, %v355
        %v358 = vmul.f32 %v356, %v356
        %v359 = vmul.f32 %v357, %v357
        %s360 = smul.u32 %s23, 8
        %v361 = vlaneseq
        %v362 = vshrl.u32 %v361, 7
        %v363 = vstv %s360
        %v364 = vadd.s32 %v363, %v362
        %vm365 = vcmp.lt.s32.totalorder %v364, 12
        %v366 = vsel %vm365, 1, 0
        %vm367 = vcmp.eq.s32.totalorder %v366, 1
        %v368 = vsel %vm367, %v358, 0.0
        %v369 = vsel %vm367, %v359, 0.0
        %v370 = vrot.slane %v368, 4
        %v371 = vadd.f32 %v368, %v370
        %v372 = vrot.slane %v371, 2
        %v373 = vadd.f32 %v371, %v372
        %v374 = vrot.slane %v373, 1
        %v375 = vadd.f32 %v373, %v374
        %v376 = vrot.slane %v369, 4
        %v377 = vadd.f32 %v369, %v376
        %v378 = vrot.slane %v377, 2
        %v379 = vadd.f32 %v377, %v378
        %v380 = vrot.slane %v379, 1
        %v381 = vadd.f32 %v379, %v380
        %v384 = vcombine.low %v375, %v381
        %v386 = vunpack.c.l.s4 1966171168
        %v387 = vunpack.c.0.s8 %v386
        %v388 = vlaneseq
        %v389 = vshrl.u32 %v388, 7
        %v390 = vsub.s32 %v387, %v389
        %v391 = vrot.slane %v384, %v390
        %v393 = vunpack.c.l.s4 1966171168
        %v394 = vunpack.c.0.s8 %v393
        %v395 = vlaneseq
        %v396 = vshrl.u32 %v395, 7
        %v397 = vsub.s32 %v394, %v396
        %v398 = vrot.slane %v391, %v397
        %v400 = vlaneseq
        %vm401 = vcmp.ge.s32.totalorder %v400, 0
        %vm402 = vcmp.lt.s32.totalorder %v400, 256
        %vm403 = vmand %vm401, %vm402
        %404 = vst.msk [vmem:[%s237] sm:$0x3] %vm403, %v398
        %s405 = sand.u32 %s104, 1
        %s406 = scalar_lea.sflag [#allocation4], %s405
        %s407 = sand.u32 %s104, 1
        %s408 = smul.addr %s407, 2
        %s409 = scalar_lea.vmem [#allocation8], %s408
        // Predicated region
        $region45: #{tpu_custom_call.1} parent=31 // pred_check
          %p410 = pneg %p114
        $region46: #{tpu_custom_call.1} parent=31 // pred_check_branch
          %412 = sbr.rel (%p410) target = $region48
        $region47: #{tpu_custom_call.1} parent=31 // pred_region
          %s414 = ssub.s32 32, 32
          %415 = vsyncadd %s406, %s414
          %s416 = smul.addr %s23, 2
          %s417 = smul.addr %s416, 16
          %s418 = scalar_lea.hbm %s3, %s417
          %s420 = sshll.u32 %s409, 4
          %s421 = int_to_ptr.vmem [resolvable:$true] %s420
          %423 = dma.vmem_to_hbm [thread:$0]  %s421, 32, %s418, %s406
        $region48: #{tpu_custom_call.1} parent=31 // pred_fallthru
          _
      $region32: #{tpu_custom_call.1} parent=5 // pred_fallthru
        _
      %p424 = scmp.le.s32.totalorder 2, %s18
      // Predicated region
      $region49: #{tpu_custom_call.1} parent=5 // pred_check
        %p425 = pneg %p424
      $region50: #{tpu_custom_call.1} parent=5 // pred_check_branch
        %427 = sbr.rel (%p425) target = $region52
      $region51: #{tpu_custom_call.1} parent=5 // pred_region
        %s428 = ssub.s32 %s18, 2
        // Predicated region
        $region53: #{tpu_custom_call.1} parent=51 // pred_check
          %p429 = pneg %p120
        $region54: #{tpu_custom_call.1} parent=51 // pred_check_branch
          %431 = sbr.rel (%p429) target = $region56
        $region55: #{tpu_custom_call.1} parent=51 // pred_region
          %s432 = sand.u32 %s105, 1
          %s433 = scalar_lea.sflag [#allocation4], %s432
          %s434 = sand.u32 %s105, 1
          %s435 = smul.addr %s434, 2
          %s436 = scalar_lea.vmem [#allocation8], %s435
          %437 = dma.done %s433, 32
        $region56: #{tpu_custom_call.1} parent=51 // pred_fallthru
          _
      $region52: #{tpu_custom_call.1} parent=5 // pred_fallthru
        _
    $region6: #{tpu_custom_call.1} parent=1 // loop_footer
      %s22 = sadd.s32 1, %s18
    $region7: #{tpu_custom_call.1} parent=1 // loop_footer_branch
      %17 = sbr.rel target = $region3
    $region8: #{tpu_custom_call.1} parent=1 // loop_exit
      _
    %438 = vsyncpa [#allocation3], 1
    %s439 = scalar_lea.sflag [#allocation3], 1
    %440 = vsyncpa %s439, 1
    %441 = vsyncpa [#allocation6], 1
    %s442 = scalar_lea.sflag [#allocation6], 1
    %443 = vsyncpa %s442, 1
    %444 = vsyncpa [#allocation4], 1
    %s445 = scalar_lea.sflag [#allocation4], 1
    %446 = vsyncpa %s445, 1

</llo_original>
